<compile_context>
chip_gen: v7x
topology: tpu7x:2x2x1
jax: 0.10.0
libtpu: 0.0.40
codegen_flags: <defaults>
</compile_context>

<pallas_src>
import jax
import jax.numpy as jnp
from jax import lax
from jax.experimental import pallas as pl
from jax.experimental.pallas import tpu as pltpu

# ---- "config" constants implied by the module ------------------------------
VOCAB_SIZE = 20
EMBEDDING_SIZE = 16   # config.EMBEDDING_SIZE
HIDDEN_SIZE_1 = 32    # config.HIDDEN_SIZE_1
NUM_LABELS = 2        # config.NUM_LABELS


def make_lstm_fc_kernel(T, Bp, H, V):
    """Builds the fused embedding + LSTM + Linear kernel for static (T, Bp, H, V)."""

    def kernel(tok_ref, emb_ref, w_ih_ref, w_hh_ref, b_ref, w_fc_ref, b_fc_ref,
               out_ref):
        # tok_ref : (T*Bp, 1) int32   time-major token ids (row = t*Bp + b)
        # emb_ref : (V, E)            embedding table
        # w_ih_ref: (E, 4H)           input->gates weight (transposed PyTorch weight_ih_l0)
        # w_hh_ref: (H, 4H)           hidden->gates weight (transposed PyTorch weight_hh_l0)
        # b_ref   : (1, 4H)           b_ih + b_hh combined
        # w_fc_ref: (H, L)            transposed fc weight
        # b_fc_ref: (1, L)            fc bias
        # out_ref : (Bp, L)           fc(hidden[-1])  (logits; softmax unused in forward)

        # ---- fused embedding lookup + hoisted input projection (one pass) ----
        tok = tok_ref[...]                                        # (T*Bp, 1) int32
        iota_v = lax.broadcasted_iota(jnp.int32, (T * Bp, V), 1)  # (T*Bp, V)
        onehot = (tok == iota_v).astype(jnp.float32)              # (T*Bp, V)

        # Compose embedding with the input projection: (V,E) @ (E,4H) -> (V,4H)
        gate_tbl = jnp.dot(emb_ref[...], w_ih_ref[...],
                           preferred_element_type=jnp.float32)
        # All-timesteps input contribution in ONE matmul: (T*Bp, 4H)
        x_gates = (jnp.dot(onehot, gate_tbl, preferred_element_type=jnp.float32)
                   + b_ref[...])

        w_hh = w_hh_ref[...]                                      # (H, 4H)

        # ---- statically unrolled recurrence (h/c live in vregs) --------------
        h = jnp.zeros((Bp, H), jnp.float32)
        c = jnp.zeros((Bp, H), jnp.float32)
        for t in range(T):                      # T is a compile-time constant
            xg = x_gates[t * Bp:(t + 1) * Bp, :]                  # (Bp, 4H), sublane-aligned
            z = xg + jnp.dot(h, w_hh, preferred_element_type=jnp.float32)
            # Full-tile activations (2 EUP pushes), then take 32-lane gate slices.
            sig = jax.nn.sigmoid(z)
            th = jnp.tanh(z)
            i = sig[:, 0 * H:1 * H]
            f = sig[:, 1 * H:2 * H]
            g = th[:, 2 * H:3 * H]
            o = sig[:, 3 * H:4 * H]
            c = f * c + i * g
            h = o * jnp.tanh(c)

        # ---- final Linear -----------------------------------------------------
        out_ref[...] = (jnp.dot(h, w_fc_ref[...],
                                preferred_element_type=jnp.float32)
                        + b_fc_ref[...])

    return kernel


def init_params(key):
    ks = jax.random.split(key, 7)
    H, E, L, V = HIDDEN_SIZE_1, EMBEDDING_SIZE, NUM_LABELS, VOCAB_SIZE
    scale = 0.1
    return {
        "emb_table": scale * jax.random.normal(ks[0], (V, E), jnp.float32),
        "w_ih": scale * jax.random.normal(ks[1], (4 * H, E), jnp.float32),  # PyTorch layout
        "w_hh": scale * jax.random.normal(ks[2], (4 * H, H), jnp.float32),
        "b_ih": scale * jax.random.normal(ks[3], (4 * H,), jnp.float32),
        "b_hh": scale * jax.random.normal(ks[4], (4 * H,), jnp.float32),
        "w_fc": scale * jax.random.normal(ks[5], (L, H), jnp.float32),      # PyTorch layout
        "b_fc": scale * jax.random.normal(ks[6], (L,), jnp.float32),
    }


def gender_classifier_forward(tokens, params):
    """tokens: (B, T) int32 token ids.  Returns (B, NUM_LABELS) logits."""
    B, T = tokens.shape
    H, E, L, V = HIDDEN_SIZE_1, EMBEDDING_SIZE, NUM_LABELS, VOCAB_SIZE

    # Pad batch to the f32 sublane multiple so every (B,*) tile is a full tile.
    Bp = max(8, ((B + 7) // 8) * 8)
    tokens_pad = jnp.zeros((Bp, T), jnp.int32).at[:B].set(tokens)
    # Time-major row ordering for the fused in-kernel gather (tiny int reshape,
    # no (T,B,E) float intermediate is ever materialized in HBM).
    tok_tm = jnp.transpose(tokens_pad, (1, 0)).reshape(T * Bp, 1)

    # Pre-transpose weights so the kernel only does row-major matmuls on the MXU.
    w_ih_t = params["w_ih"].T                            # (E, 4H)
    w_hh_t = params["w_hh"].T                            # (H, 4H)
    b_comb = (params["b_ih"] + params["b_hh"]).reshape(1, 4 * H)
    w_fc_t = params["w_fc"].T                            # (H, L)
    b_fc = params["b_fc"].reshape(1, L)

    vmem = pl.BlockSpec(memory_space=pltpu.MemorySpace.VMEM)

    # TODO(synk): at larger batch sizes, add grid=(Bp // 8,) with
    # dimension_semantics=("parallel",) to engage the second TensorCore on v7x.
    out = pl.pallas_call(
        make_lstm_fc_kernel(T, Bp, H, V),
        out_shape=jax.ShapeDtypeStruct((Bp, L), jnp.float32),
        in_specs=[vmem] * 7,
        out_specs=vmem,
    )(tok_tm, params["emb_table"], w_ih_t, w_hh_t, b_comb, w_fc_t, b_fc)
    return out[:B]


def reference_forward(tokens, params):
    """Pure-JAX reference of the PyTorch forward (for a sanity check)."""
    H = HIDDEN_SIZE_1
    embedded = params["emb_table"][tokens]               # (B, T, E)
    B, T, E = embedded.shape
    h = jnp.zeros((B, H), jnp.float32)
    c = jnp.zeros((B, H), jnp.float32)
    for t in range(T):
        z = (embedded[:, t, :] @ params["w_ih"].T
             + h @ params["w_hh"].T
             + params["b_ih"] + params["b_hh"])
        i = jax.nn.sigmoid(z[:, 0 * H:1 * H])
        f = jax.nn.sigmoid(z[:, 1 * H:2 * H])
        g = jnp.tanh(z[:, 2 * H:3 * H])
        o = jax.nn.sigmoid(z[:, 3 * H:4 * H])
        c = f * c + i * g
        h = o * jnp.tanh(c)
    return h @ params["w_fc"].T + params["b_fc"]


if __name__ == "__main__":
    key = jax.random.PRNGKey(0)
    pkey, tkey = jax.random.split(key)
    params = init_params(pkey)

    B, T = 2, 8
    tokens = jax.random.randint(tkey, (B, T), 0, VOCAB_SIZE, dtype=jnp.int32)

    logits = gender_classifier_forward(tokens, params)
    logits = jax.block_until_ready(logits)

    ref = reference_forward(tokens, params)
    assert logits.shape == (B, NUM_LABELS)
    assert jnp.allclose(logits, ref, atol=1e-4, rtol=1e-4), (logits, ref)

    print("KERNEL_OK")
</pallas_src>

<mosaic_0001>
module attributes {stable_mosaic.version = 11 : i64} {
  func.func @kernel(%arg0: memref<64x1xi32, #tpu.memory_space<vmem>>, %arg1: memref<20x16xf32, #tpu.memory_space<vmem>>, %arg2: memref<16x128xf32, #tpu.memory_space<vmem>>, %arg3: memref<32x128xf32, #tpu.memory_space<vmem>>, %arg4: memref<1x128xf32, #tpu.memory_space<vmem>>, %arg5: memref<32x2xf32, #tpu.memory_space<vmem>>, %arg6: memref<1x2xf32, #tpu.memory_space<vmem>>, %arg7: memref<8x2xf32, #tpu.memory_space<vmem>>) attributes {dimension_semantics = [], scalar_prefetch = 0 : i64, scratch_operands = 0 : i64, tpu.core_type = #tpu.core_type<tc>} {
    %c0 = arith.constant 0 : index
    %c0_0 = arith.constant 0 : index
    %0 = vector.load %arg0[%c0, %c0_0] : memref<64x1xi32, #tpu.memory_space<vmem>>, vector<64x1xi32>
    %1 = tpu.iota {dimensions = array<i32: 1>} : vector<64x20xi32>
    %2 = vector.broadcast %0 : vector<64x1xi32> to vector<64x20xi32>
    %3 = arith.cmpi eq, %2, %1 : vector<64x20xi32>
    %4 = arith.extui %3 : vector<64x20xi1> to vector<64x20xi32>
    %5 = arith.sitofp %4 : vector<64x20xi32> to vector<64x20xf32>
    %c0_1 = arith.constant 0 : index
    %c0_2 = arith.constant 0 : index
    %6 = vector.load %arg1[%c0_1, %c0_2] : memref<20x16xf32, #tpu.memory_space<vmem>>, vector<20x16xf32>
    %c0_3 = arith.constant 0 : index
    %c0_4 = arith.constant 0 : index
    %7 = vector.load %arg2[%c0_3, %c0_4] : memref<16x128xf32, #tpu.memory_space<vmem>>, vector<16x128xf32>
    %cst = arith.constant dense<0.000000e+00> : vector<20x128xf32>
    %8 = tpu.matmul %6, %7, %cst {dimension_numbers = #tpu.dot_dimension_numbers<[1], [0], [0], [1], [0, 0, 1, 1], [], []>} : vector<20x16xf32>, vector<16x128xf32>, vector<20x128xf32> -> vector<20x128xf32>
    %cst_5 = arith.constant dense<0.000000e+00> : vector<64x128xf32>
    %9 = tpu.matmul %5, %8, %cst_5 {dimension_numbers = #tpu.dot_dimension_numbers<[1], [0], [0], [1], [0, 0, 1, 1], [], []>} : vector<64x20xf32>, vector<20x128xf32>, vector<64x128xf32> -> vector<64x128xf32>
    %c0_6 = arith.constant 0 : index
    %c0_7 = arith.constant 0 : index
    %10 = vector.load %arg4[%c0_6, %c0_7] : memref<1x128xf32, #tpu.memory_space<vmem>>, vector<1x128xf32>
    %11 = vector.broadcast %10 : vector<1x128xf32> to vector<64x128xf32>
    %12 = arith.addf %9, %11 : vector<64x128xf32>
    %c0_8 = arith.constant 0 : index
    %c0_9 = arith.constant 0 : index
    %13 = vector.load %arg3[%c0_8, %c0_9] : memref<32x128xf32, #tpu.memory_space<vmem>>, vector<32x128xf32>
    %cst_10 = arith.constant 0.000000e+00 : f32
    %14 = vector.broadcast %cst_10 : f32 to vector<8x32xf32>
    %cst_11 = arith.constant 0.000000e+00 : f32
    %15 = vector.broadcast %cst_11 : f32 to vector<8x32xf32>
    %16 = vector.extract_strided_slice %12 {offsets = [0, 0], sizes = [8, 128], strides = [1, 1]} : vector<64x128xf32> to vector<8x128xf32>
    %cst_12 = arith.constant dense<0.000000e+00> : vector<8x128xf32>
    %17 = tpu.matmul %14, %13, %cst_12 {dimension_numbers = #tpu.dot_dimension_numbers<[1], [0], [0], [1], [0, 0, 1, 1], [], []>} : vector<8x32xf32>, vector<32x128xf32>, vector<8x128xf32> -> vector<8x128xf32>
    %18 = arith.addf %16, %17 : vector<8x128xf32>
    %19 = arith.negf %18 : vector<8x128xf32>
    %20 = math.exp %19 : vector<8x128xf32>
    %cst_13 = arith.constant 1.000000e+00 : f32
    %21 = vector.broadcast %cst_13 : f32 to vector<8x128xf32>
    %22 = arith.addf %21, %20 : vector<8x128xf32>
    %23 = arith.divf %21, %22 : vector<8x128xf32>
    %24 = math.tanh %18 : vector<8x128xf32>
    %25 = vector.extract_strided_slice %23 {offsets = [0, 0], sizes = [8, 32], strides = [1, 1]} : vector<8x128xf32> to vector<8x32xf32>
    %26 = vector.extract_strided_slice %23 {offsets = [0, 32], sizes = [8, 32], strides = [1, 1]} : vector<8x128xf32> to vector<8x32xf32>
    %27 = vector.extract_strided_slice %24 {offsets = [0, 64], sizes = [8, 32], strides = [1, 1]} : vector<8x128xf32> to vector<8x32xf32>
    %28 = vector.extract_strided_slice %23 {offsets = [0, 96], sizes = [8, 32], strides = [1, 1]} : vector<8x128xf32> to vector<8x32xf32>
    %29 = arith.mulf %26, %15 : vector<8x32xf32>
    %30 = arith.mulf %25, %27 : vector<8x32xf32>
    %31 = arith.addf %29, %30 : vector<8x32xf32>
    %32 = math.tanh %31 : vector<8x32xf32>
    %33 = arith.mulf %28, %32 : vector<8x32xf32>
    %34 = vector.extract_strided_slice %12 {offsets = [8, 0], sizes = [8, 128], strides = [1, 1]} : vector<64x128xf32> to vector<8x128xf32>
    %cst_14 = arith.constant dense<0.000000e+00> : vector<8x128xf32>
    %35 = tpu.matmul %33, %13, %cst_14 {dimension_numbers = #tpu.dot_dimension_numbers<[1], [0], [0], [1], [0, 0, 1, 1], [], []>} : vector<8x32xf32>, vector<32x128xf32>, vector<8x128xf32> -> vector<8x128xf32>
    %36 = arith.addf %34, %35 : vector<8x128xf32>
    %37 = arith.negf %36 : vector<8x128xf32>
    %38 = math.exp %37 : vector<8x128xf32>
    %cst_15 = arith.constant 1.000000e+00 : f32
    %39 = vector.broadcast %cst_15 : f32 to vector<8x128xf32>
    %40 = arith.addf %39, %38 : vector<8x128xf32>
    %41 = arith.divf %39, %40 : vector<8x128xf32>
    %42 = math.tanh %36 : vector<8x128xf32>
    %43 = vector.extract_strided_slice %41 {offsets = [0, 0], sizes = [8, 32], strides = [1, 1]} : vector<8x128xf32> to vector<8x32xf32>
    %44 = vector.extract_strided_slice %41 {offsets = [0, 32], sizes = [8, 32], strides = [1, 1]} : vector<8x128xf32> to vector<8x32xf32>
    %45 = vector.extract_strided_slice %42 {offsets = [0, 64], sizes = [8, 32], strides = [1, 1]} : vector<8x128xf32> to vector<8x32xf32>
    %46 = vector.extract_strided_slice %41 {offsets = [0, 96], sizes = [8, 32], strides = [1, 1]} : vector<8x128xf32> to vector<8x32xf32>
    %47 = arith.mulf %44, %31 : vector<8x32xf32>
    %48 = arith.mulf %43, %45 : vector<8x32xf32>
    %49 = arith.addf %47, %48 : vector<8x32xf32>
    %50 = math.tanh %49 : vector<8x32xf32>
    %51 = arith.mulf %46, %50 : vector<8x32xf32>
    %52 = vector.extract_strided_slice %12 {offsets = [16, 0], sizes = [8, 128], strides = [1, 1]} : vector<64x128xf32> to vector<8x128xf32>
    %cst_16 = arith.constant dense<0.000000e+00> : vector<8x128xf32>
    %53 = tpu.matmul %51, %13, %cst_16 {dimension_numbers = #tpu.dot_dimension_numbers<[1], [0], [0], [1], [0, 0, 1, 1], [], []>} : vector<8x32xf32>, vector<32x128xf32>, vector<8x128xf32> -> vector<8x128xf32>
    %54 = arith.addf %52, %53 : vector<8x128xf32>
    %55 = arith.negf %54 : vector<8x128xf32>
    %56 = math.exp %55 : vector<8x128xf32>
    %cst_17 = arith.constant 1.000000e+00 : f32
    %57 = vector.broadcast %cst_17 : f32 to vector<8x128xf32>
    %58 = arith.addf %57, %56 : vector<8x128xf32>
    %59 = arith.divf %57, %58 : vector<8x128xf32>
    %60 = math.tanh %54 : vector<8x128xf32>
    %61 = vector.extract_strided_slice %59 {offsets = [0, 0], sizes = [8, 32], strides = [1, 1]} : vector<8x128xf32> to vector<8x32xf32>
    %62 = vector.extract_strided_slice %59 {offsets = [0, 32], sizes = [8, 32], strides = [1, 1]} : vector<8x128xf32> to vector<8x32xf32>
    %63 = vector.extract_strided_slice %60 {offsets = [0, 64], sizes = [8, 32], strides = [1, 1]} : vector<8x128xf32> to vector<8x32xf32>
    %64 = vector.extract_strided_slice %59 {offsets = [0, 96], sizes = [8, 32], strides = [1, 1]} : vector<8x128xf32> to vector<8x32xf32>
    %65 = arith.mulf %62, %49 : vector<8x32xf32>
    %66 = arith.mulf %61, %63 : vector<8x32xf32>
    %67 = arith.addf %65, %66 : vector<8x32xf32>
    %68 = math.tanh %67 : vector<8x32xf32>
    %69 = arith.mulf %64, %68 : vector<8x32xf32>
    %70 = vector.extract_strided_slice %12 {offsets = [24, 0], sizes = [8, 128], strides = [1, 1]} : vector<64x128xf32> to vector<8x128xf32>
    %cst_18 = arith.constant dense<0.000000e+00> : vector<8x128xf32>
    %71 = tpu.matmul %69, %13, %cst_18 {dimension_numbers = #tpu.dot_dimension_numbers<[1], [0], [0], [1], [0, 0, 1, 1], [], []>} : vector<8x32xf32>, vector<32x128xf32>, vector<8x128xf32> -> vector<8x128xf32>
    %72 = arith.addf %70, %71 : vector<8x128xf32>
    %73 = arith.negf %72 : vector<8x128xf32>
    %74 = math.exp %73 : vector<8x128xf32>
    %cst_19 = arith.constant 1.000000e+00 : f32
    %75 = vector.broadcast %cst_19 : f32 to vector<8x128xf32>
    %76 = arith.addf %75, %74 : vector<8x128xf32>
    %77 = arith.divf %75, %76 : vector<8x128xf32>
    %78 = math.tanh %72 : vector<8x128xf32>
    %79 = vector.extract_strided_slice %77 {offsets = [0, 0], sizes = [8, 32], strides = [1, 1]} : vector<8x128xf32> to vector<8x32xf32>
    %80 = vector.extract_strided_slice %77 {offsets = [0, 32], sizes = [8, 32], strides = [1, 1]} : vector<8x128xf32> to vector<8x32xf32>
    %81 = vector.extract_strided_slice %78 {offsets = [0, 64], sizes = [8, 32], strides = [1, 1]} : vector<8x128xf32> to vector<8x32xf32>
    %82 = vector.extract_strided_slice %77 {offsets = [0, 96], sizes = [8, 32], strides = [1, 1]} : vector<8x128xf32> to vector<8x32xf32>
    %83 = arith.mulf %80, %67 : vector<8x32xf32>
    %84 = arith.mulf %79, %81 : vector<8x32xf32>
    %85 = arith.addf %83, %84 : vector<8x32xf32>
    %86 = math.tanh %85 : vector<8x32xf32>
    %87 = arith.mulf %82, %86 : vector<8x32xf32>
    %88 = vector.extract_strided_slice %12 {offsets = [32, 0], sizes = [8, 128], strides = [1, 1]} : vector<64x128xf32> to vector<8x128xf32>
    %cst_20 = arith.constant dense<0.000000e+00> : vector<8x128xf32>
    %89 = tpu.matmul %87, %13, %cst_20 {dimension_numbers = #tpu.dot_dimension_numbers<[1], [0], [0], [1], [0, 0, 1, 1], [], []>} : vector<8x32xf32>, vector<32x128xf32>, vector<8x128xf32> -> vector<8x128xf32>
    %90 = arith.addf %88, %89 : vector<8x128xf32>
    %91 = arith.negf %90 : vector<8x128xf32>
    %92 = math.exp %91 : vector<8x128xf32>
    %cst_21 = arith.constant 1.000000e+00 : f32
    %93 = vector.broadcast %cst_21 : f32 to vector<8x128xf32>
    %94 = arith.addf %93, %92 : vector<8x128xf32>
    %95 = arith.divf %93, %94 : vector<8x128xf32>
    %96 = math.tanh %90 : vector<8x128xf32>
    %97 = vector.extract_strided_slice %95 {offsets = [0, 0], sizes = [8, 32], strides = [1, 1]} : vector<8x128xf32> to vector<8x32xf32>
    %98 = vector.extract_strided_slice %95 {offsets = [0, 32], sizes = [8, 32], strides = [1, 1]} : vector<8x128xf32> to vector<8x32xf32>
    %99 = vector.extract_strided_slice %96 {offsets = [0, 64], sizes = [8, 32], strides = [1, 1]} : vector<8x128xf32> to vector<8x32xf32>
    %100 = vector.extract_strided_slice %95 {offsets = [0, 96], sizes = [8, 32], strides = [1, 1]} : vector<8x128xf32> to vector<8x32xf32>
    %101 = arith.mulf %98, %85 : vector<8x32xf32>
    %102 = arith.mulf %97, %99 : vector<8x32xf32>
    %103 = arith.addf %101, %102 : vector<8x32xf32>
    %104 = math.tanh %103 : vector<8x32xf32>
    %105 = arith.mulf %100, %104 : vector<8x32xf32>
    %106 = vector.extract_strided_slice %12 {offsets = [40, 0], sizes = [8, 128], strides = [1, 1]} : vector<64x128xf32> to vector<8x128xf32>
    %cst_22 = arith.constant dense<0.000000e+00> : vector<8x128xf32>
    %107 = tpu.matmul %105, %13, %cst_22 {dimension_numbers = #tpu.dot_dimension_numbers<[1], [0], [0], [1], [0, 0, 1, 1], [], []>} : vector<8x32xf32>, vector<32x128xf32>, vector<8x128xf32> -> vector<8x128xf32>
    %108 = arith.addf %106, %107 : vector<8x128xf32>
    %109 = arith.negf %108 : vector<8x128xf32>
    %110 = math.exp %109 : vector<8x128xf32>
    %cst_23 = arith.constant 1.000000e+00 : f32
    %111 = vector.broadcast %cst_23 : f32 to vector<8x128xf32>
    %112 = arith.addf %111, %110 : vector<8x128xf32>
    %113 = arith.divf %111, %112 : vector<8x128xf32>
    %114 = math.tanh %108 : vector<8x128xf32>
    %115 = vector.extract_strided_slice %113 {offsets = [0, 0], sizes = [8, 32], strides = [1, 1]} : vector<8x128xf32> to vector<8x32xf32>
    %116 = vector.extract_strided_slice %113 {offsets = [0, 32], sizes = [8, 32], strides = [1, 1]} : vector<8x128xf32> to vector<8x32xf32>
    %117 = vector.extract_strided_slice %114 {offsets = [0, 64], sizes = [8, 32], strides = [1, 1]} : vector<8x128xf32> to vector<8x32xf32>
    %118 = vector.extract_strided_slice %113 {offsets = [0, 96], sizes = [8, 32], strides = [1, 1]} : vector<8x128xf32> to vector<8x32xf32>
    %119 = arith.mulf %116, %103 : vector<8x32xf32>
    %120 = arith.mulf %115, %117 : vector<8x32xf32>
    %121 = arith.addf %119, %120 : vector<8x32xf32>
    %122 = math.tanh %121 : vector<8x32xf32>
    %123 = arith.mulf %118, %122 : vector<8x32xf32>
    %124 = vector.extract_strided_slice %12 {offsets = [48, 0], sizes = [8, 128], strides = [1, 1]} : vector<64x128xf32> to vector<8x128xf32>
    %cst_24 = arith.constant dense<0.000000e+00> : vector<8x128xf32>
    %125 = tpu.matmul %123, %13, %cst_24 {dimension_numbers = #tpu.dot_dimension_numbers<[1], [0], [0], [1], [0, 0, 1, 1], [], []>} : vector<8x32xf32>, vector<32x128xf32>, vector<8x128xf32> -> vector<8x128xf32>
    %126 = arith.addf %124, %125 : vector<8x128xf32>
    %127 = arith.negf %126 : vector<8x128xf32>
    %128 = math.exp %127 : vector<8x128xf32>
    %cst_25 = arith.constant 1.000000e+00 : f32
    %129 = vector.broadcast %cst_25 : f32 to vector<8x128xf32>
    %130 = arith.addf %129, %128 : vector<8x128xf32>
    %131 = arith.divf %129, %130 : vector<8x128xf32>
    %132 = math.tanh %126 : vector<8x128xf32>
    %133 = vector.extract_strided_slice %131 {offsets = [0, 0], sizes = [8, 32], strides = [1, 1]} : vector<8x128xf32> to vector<8x32xf32>
    %134 = vector.extract_strided_slice %131 {offsets = [0, 32], sizes = [8, 32], strides = [1, 1]} : vector<8x128xf32> to vector<8x32xf32>
    %135 = vector.extract_strided_slice %132 {offsets = [0, 64], sizes = [8, 32], strides = [1, 1]} : vector<8x128xf32> to vector<8x32xf32>
    %136 = vector.extract_strided_slice %131 {offsets = [0, 96], sizes = [8, 32], strides = [1, 1]} : vector<8x128xf32> to vector<8x32xf32>
    %137 = arith.mulf %134, %121 : vector<8x32xf32>
    %138 = arith.mulf %133, %135 : vector<8x32xf32>
    %139 = arith.addf %137, %138 : vector<8x32xf32>
    %140 = math.tanh %139 : vector<8x32xf32>
    %141 = arith.mulf %136, %140 : vector<8x32xf32>
    %142 = vector.extract_strided_slice %12 {offsets = [56, 0], sizes = [8, 128], strides = [1, 1]} : vector<64x128xf32> to vector<8x128xf32>
    %cst_26 = arith.constant dense<0.000000e+00> : vector<8x128xf32>
    %143 = tpu.matmul %141, %13, %cst_26 {dimension_numbers = #tpu.dot_dimension_numbers<[1], [0], [0], [1], [0, 0, 1, 1], [], []>} : vector<8x32xf32>, vector<32x128xf32>, vector<8x128xf32> -> vector<8x128xf32>
    %144 = arith.addf %142, %143 : vector<8x128xf32>
    %145 = arith.negf %144 : vector<8x128xf32>
    %146 = math.exp %145 : vector<8x128xf32>
    %cst_27 = arith.constant 1.000000e+00 : f32
    %147 = vector.broadcast %cst_27 : f32 to vector<8x128xf32>
    %148 = arith.addf %147, %146 : vector<8x128xf32>
    %149 = arith.divf %147, %148 : vector<8x128xf32>
    %150 = math.tanh %144 : vector<8x128xf32>
    %151 = vector.extract_strided_slice %149 {offsets = [0, 0], sizes = [8, 32], strides = [1, 1]} : vector<8x128xf32> to vector<8x32xf32>
    %152 = vector.extract_strided_slice %149 {offsets = [0, 32], sizes = [8, 32], strides = [1, 1]} : vector<8x128xf32> to vector<8x32xf32>
    %153 = vector.extract_strided_slice %150 {offsets = [0, 64], sizes = [8, 32], strides = [1, 1]} : vector<8x128xf32> to vector<8x32xf32>
    %154 = vector.extract_strided_slice %149 {offsets = [0, 96], sizes = [8, 32], strides = [1, 1]} : vector<8x128xf32> to vector<8x32xf32>
    %155 = arith.mulf %152, %139 : vector<8x32xf32>
    %156 = arith.mulf %151, %153 : vector<8x32xf32>
    %157 = arith.addf %155, %156 : vector<8x32xf32>
    %158 = math.tanh %157 : vector<8x32xf32>
    %159 = arith.mulf %154, %158 : vector<8x32xf32>
    %c0_28 = arith.constant 0 : index
    %c0_29 = arith.constant 0 : index
    %160 = vector.load %arg5[%c0_28, %c0_29] : memref<32x2xf32, #tpu.memory_space<vmem>>, vector<32x2xf32>
    %cst_30 = arith.constant dense<0.000000e+00> : vector<8x2xf32>
    %161 = tpu.matmul %159, %160, %cst_30 {dimension_numbers = #tpu.dot_dimension_numbers<[1], [0], [0], [1], [0, 0, 1, 1], [], []>} : vector<8x32xf32>, vector<32x2xf32>, vector<8x2xf32> -> vector<8x2xf32>
    %c0_31 = arith.constant 0 : index
    %c0_32 = arith.constant 0 : index
    %162 = vector.load %arg6[%c0_31, %c0_32] : memref<1x2xf32, #tpu.memory_space<vmem>>, vector<1x2xf32>
    %163 = vector.broadcast %162 : vector<1x2xf32> to vector<8x2xf32>
    %164 = arith.addf %161, %163 : vector<8x2xf32>
    %c0_33 = arith.constant 0 : index
    %c0_34 = arith.constant 0 : index
    %165 = vector.load %arg7[%c0_33, %c0_34] : memref<8x2xf32, #tpu.memory_space<vmem>>, vector<8x2xf32>
    tpu.vector_store %arg7[%c0_33, %c0_34], %164 {strides = array<i32>} : memref<8x2xf32, #tpu.memory_space<vmem>>, vector<8x2xf32>,
    return
  }
}

</mosaic_0001>

<llo_original>
// kernel: tpu_custom_call.1
$region0: #{tpu_custom_call.1}
  #allocation0 [shape = 'u32[]', space=smem, size = 0x4, offset = 0x4, fixed_abs, tag = 'smem constant byte address 0x4 - core index']
  #allocation1 [shape = 'u32[144,128]{1,0:T(1,128)}', space=vmem, size = 0x12000, scoped, tag = 'internal scratch']
  %s0 = inlined_call_operand.vmem [shape: s32[64,1], index: 0, kind: input, shape index: {}]
  %s1 = inlined_call_operand.vmem [shape: f32[20,16], index: 1, kind: input, shape index: {}]
  %s2 = inlined_call_operand.vmem [shape: f32[16,128], index: 2, kind: input, shape index: {}]
  %s3 = inlined_call_operand.vmem [shape: f32[32,128], index: 3, kind: input, shape index: {}]
  %s4 = inlined_call_operand.vmem [shape: f32[1,128], index: 4, kind: input, shape index: {}]
  %s5 = inlined_call_operand.vmem [shape: f32[32,2], index: 5, kind: input, shape index: {}]
  %s6 = inlined_call_operand.vmem [shape: f32[1,2], index: 6, kind: input, shape index: {}]
  %s7 = inlined_call_operand.vmem [shape: f32[8,2], index: 7, kind: output, shape index: {}]
  %s8 = sld [smem:[#allocation0]]
  $region38: #{tpu_custom_call.1} parent=0
    _
  %s10 = ssub.s32 1, %s8
  %s11 = scalar_select 0, %s10, %s8
  // Predicated region
  $region2: #{tpu_custom_call.1} parent=0 // pred_check
    _
  $region3: #{tpu_custom_call.1} parent=0 // pred_check_branch
    %13 = sbr.rel (0) target = $region5
  $region4: #{tpu_custom_call.1} parent=0 // pred_region
    _
  $region5: #{tpu_custom_call.1} parent=0 // pred_fallthru
    _
  // Predicated region
  $region6: #{tpu_custom_call.1} parent=0 // pred_check
    _
  $region7: #{tpu_custom_call.1} parent=0 // pred_check_branch
    %15 = sbr.rel (0) target = $region9
  $region8: #{tpu_custom_call.1} parent=0 // pred_region
    _
  $region9: #{tpu_custom_call.1} parent=0 // pred_fallthru
    _
  // Predicated region
  $region10: #{tpu_custom_call.1} parent=0 // pred_check
    _
  $region11: #{tpu_custom_call.1} parent=0 // pred_check_branch
    %17 = sbr.rel (0) target = $region13
  $region12: #{tpu_custom_call.1} parent=0 // pred_region
    _
  $region13: #{tpu_custom_call.1} parent=0 // pred_fallthru
    _
  // Predicated region
  $region14: #{tpu_custom_call.1} parent=0 // pred_check
    _
  $region15: #{tpu_custom_call.1} parent=0 // pred_check_branch
    %19 = sbr.rel (0) target = $region17
  $region16: #{tpu_custom_call.1} parent=0 // pred_region
    _
  $region17: #{tpu_custom_call.1} parent=0 // pred_fallthru
    _
  // Predicated region
  $region18: #{tpu_custom_call.1} parent=0 // pred_check
    _
  $region19: #{tpu_custom_call.1} parent=0 // pred_check_branch
    %21 = sbr.rel (0) target = $region21
  $region20: #{tpu_custom_call.1} parent=0 // pred_region
    _
  $region21: #{tpu_custom_call.1} parent=0 // pred_fallthru
    _
  // Predicated region
  $region22: #{tpu_custom_call.1} parent=0 // pred_check
    _
  $region23: #{tpu_custom_call.1} parent=0 // pred_check_branch
    %23 = sbr.rel (0) target = $region25
  $region24: #{tpu_custom_call.1} parent=0 // pred_region
    _
  $region25: #{tpu_custom_call.1} parent=0 // pred_fallthru
    _
  // Predicated region
  $region26: #{tpu_custom_call.1} parent=0 // pred_check
    _
  $region27: #{tpu_custom_call.1} parent=0 // pred_check_branch
    %25 = sbr.rel (0) target = $region29
  $region28: #{tpu_custom_call.1} parent=0 // pred_region
    _
  $region29: #{tpu_custom_call.1} parent=0 // pred_fallthru
    _
  %v26 = vld [vmem:[%s0] sm:$0xff]
  %v27 = vld [vmem:[%s0 + $0x8] sm:$0xff]
  %v28 = vld [vmem:[%s0 + $0x10] sm:$0xff]
  %v29 = vld [vmem:[%s0 + $0x18] sm:$0xff]
  %v30 = vld [vmem:[%s0 + $0x20] sm:$0xff]
  %v31 = vld [vmem:[%s0 + $0x28] sm:$0xff]
  %v32 = vld [vmem:[%s0 + $0x30] sm:$0xff]
  %v33 = vld [vmem:[%s0 + $0x38] sm:$0xff]
  %v34 = vlaneseq
  %v35 = vand.u32 %v34, 127
  %36 = vset.pattern.permute.xlu0 0
  %37 = vperm.xlu0 %36, %v26
  %v38 = vpop.permute.xlu0 %37
  %39 = vset.pattern.permute.xlu0 0
  %40 = vperm.xlu0 %39, %v27
  %v41 = vpop.permute.xlu0 %40
  %42 = vset.pattern.permute.xlu0 0
  %43 = vperm.xlu0 %42, %v28
  %v44 = vpop.permute.xlu0 %43
  %45 = vset.pattern.permute.xlu0 0
  %46 = vperm.xlu0 %45, %v29
  %v47 = vpop.permute.xlu0 %46
  %48 = vset.pattern.permute.xlu0 0
  %49 = vperm.xlu0 %48, %v30
  %v50 = vpop.permute.xlu0 %49
  %51 = vset.pattern.permute.xlu0 0
  %52 = vperm.xlu0 %51, %v31
  %v53 = vpop.permute.xlu0 %52
  %54 = vset.pattern.permute.xlu0 0
  %55 = vperm.xlu0 %54, %v32
  %v56 = vpop.permute.xlu0 %55
  %57 = vset.pattern.permute.xlu0 0
  %58 = vperm.xlu0 %57, %v33
  %v59 = vpop.permute.xlu0 %58
  %vm60 = vcmp.eq.s32.totalorder %v38, %v35
  %vm61 = vcmp.eq.s32.totalorder %v41, %v35
  %vm62 = vcmp.eq.s32.totalorder %v44, %v35
  %vm63 = vcmp.eq.s32.totalorder %v47, %v35
  %vm64 = vcmp.eq.s32.totalorder %v50, %v35
  %vm65 = vcmp.eq.s32.totalorder %v53, %v35
  %vm66 = vcmp.eq.s32.totalorder %v56, %v35
  %vm67 = vcmp.eq.s32.totalorder %v59, %v35
  %v68 = vsel %vm60, 1, 0
  %v69 = vsel %vm61, 1, 0
  %v70 = vsel %vm62, 1, 0
  %v71 = vsel %vm63, 1, 0
  %v72 = vsel %vm64, 1, 0
  %v73 = vsel %vm65, 1, 0
  %v74 = vsel %vm66, 1, 0
  %v75 = vsel %vm67, 1, 0
  %v76 = vcvt.s32.f32 %v68
  %v77 = vcvt.s32.f32 %v69
  %v78 = vcvt.s32.f32 %v70
  %v79 = vcvt.s32.f32 %v71
  %v80 = vcvt.s32.f32 %v72
  %v81 = vcvt.s32.f32 %v73
  %v82 = vcvt.s32.f32 %v74
  %v83 = vcvt.s32.f32 %v75
  %v84 = vld [vmem:[%s1] sm:$0xff]
  %v85 = vld [vmem:[%s1 + $0x8] sm:$0xff]
  %v86 = vld [vmem:[%s1 + $0x10] sm:$0xf]
  %v87 = vld [vmem:[%s2] sm:$0xff]
  %v88 = vld [vmem:[%s2 + $0x8] sm:$0xff]
  %vm89 = vcmask 130048
  %v91 = vsel %vm89, %v84, 0
  %v94 = vsel %vm89, %v85, 0
  %v97 = vsel %vm89, %v86, 0
  %99 = vmatprep.subr.mxu0 0.0
  %100 = vmatpush1.msra.mxu0 %v87
  %101 = vmatprep.subr.mxu0 0.0
  %102 = vmatpush1.msra.mxu0 %v88
  %103 = vmatprep.subr.mxu0 0.0
  %104 = vmatpush1.msra.mxu0 0.0
  %105 = vmatprep.subr.mxu0 0.0
  %106 = vmatpush1.msra.mxu0 0.0
  %107 = vmatprep.subr.mxu0 0.0
  %108 = vmatpush1.msra.mxu0 0.0
  %109 = vmatprep.subr.mxu0 0.0
  %110 = vmatpush1.msra.mxu0 0.0
  %111 = vmatprep.subr.mxu0 0.0
  %112 = vmatpush1.msra.mxu0 0.0
  %113 = vmatprep.subr.mxu0 0.0
  %114 = vmatpush1.msra.mxu0 0.0
  %115 = vmatprep.subr.mxu0 0.0
  %116 = vmatpush1.msra.mxu0 0.0
  %117 = vmatprep.subr.mxu0 0.0
  %118 = vmatpush1.msra.mxu0 0.0
  %119 = vmatprep.subr.mxu0 0.0
  %120 = vmatpush1.msra.mxu0 0.0
  %121 = vmatprep.subr.mxu0 0.0
  %122 = vmatpush1.msra.mxu0 0.0
  %123 = vmatprep.subr.mxu0 0.0
  %124 = vmatpush1.msra.mxu0 0.0
  %125 = vmatprep.subr.mxu0 0.0
  %126 = vmatpush1.msra.mxu0 0.0
  %127 = vmatprep.subr.mxu0 0.0
  %128 = vmatpush1.msra.mxu0 0.0
  %129 = vmatprep.subr.mxu0 0.0
  %130 = vmatpush1.msra.mxu0 0.0
  %131 = vmatprep.subr.mxu0 0.0
  %132 = vmatpush1.msra.mxu0 0.0
  %133 = vmatprep.subr.mxu0 0.0
  %134 = vmatpush1.msra.mxu0 0.0
  %135 = vmatprep.subr.mxu0 0.0
  %136 = vmatpush1.msra.mxu0 0.0
  %137 = vmatprep.subr.mxu0 0.0
  %138 = vmatpush1.msra.mxu0 0.0
  %139 = vmatprep.subr.mxu0 0.0
  %140 = vmatpush1.msra.mxu0 0.0
  %141 = vmatprep.subr.mxu0 0.0
  %142 = vmatpush1.msra.mxu0 0.0
  %143 = vmatprep.subr.mxu0 0.0
  %144 = vmatpush1.msra.mxu0 0.0
  %145 = vmatprep.subr.mxu0 0.0
  %146 = vmatpush1.msra.mxu0 0.0
  %147 = vmatprep.subr.mxu0 0.0
  %148 = vmatpush1.msra.mxu0 0.0
  %149 = vmatprep.subr.mxu0 0.0
  %150 = vmatpush1.msra.mxu0 0.0
  %151 = vmatprep.subr.mxu0 0.0
  %152 = vmatpush1.msra.mxu0 0.0
  %153 = vmatprep.subr.mxu0 0.0
  %154 = vmatpush1.msra.mxu0 0.0
  %155 = vmatprep.subr.mxu0 0.0
  %156 = vmatpush1.msra.mxu0 0.0
  %157 = vmatprep.subr.mxu0 0.0
  %158 = vmatpush1.msra.mxu0 0.0
  %159 = vmatprep.subr.mxu0 0.0
  %160 = vmatpush1.msra.mxu0 0.0
  %161 = vmatprep.subr.mxu0 0.0
  %162 = vmatpush1.msra.mxu0 0.0
  %163 = vmatprep.mubr.f32.mxu0 0.0
  %164 = vmatmul.mubr.f32.gmra.mrb[0].mxu0 %v91
  %v165 = vpop.f32.mrb[0].mxu0
  %v166 = vadd.f32 0.0, %v165
  %v167 = vpop.f32.mrb[0].mxu0
  %168 = vmatprep.mubr.f32.mxu0 0.0
  %169 = vmatmul.mubr.f32.gmra.mrb[0].mxu0 %v94
  %v170 = vpop.f32.mrb[0].mxu0
  %v171 = vadd.f32 0.0, %v170
  %v172 = vpop.f32.mrb[0].mxu0
  %173 = vmatprep.mubr.f32.mxu0 0.0
  %174 = vmatmul.mubr.f32.gmra.mrb[0].mxu0 %v97
  %v175 = vpop.f32.mrb[0].mxu0
  %v176 = vadd.f32 0.0, %v175
  %v177 = vpop.f32.mrb[0].mxu0
  %178 = vdwg.mxu0
  %v179 = vld [vmem:[%s4] sm:$0x1]
  %v181 = vlaneseq
  %v182 = vshrl.u32 %v181, 7
  %v183 = vsub.s32 0, %v182
  %v184 = vrot.slane %v179, %v183
  %vm186 = vcmask 162816
  %v188 = vsel %vm186, %v76, 0
  %v191 = vsel %vm186, %v77, 0
  %v194 = vsel %vm186, %v78, 0
  %v197 = vsel %vm186, %v79, 0
  %v200 = vsel %vm186, %v80, 0
  %v203 = vsel %vm186, %v81, 0
  %v206 = vsel %vm186, %v82, 0
  %v209 = vsel %vm186, %v83, 0
  %vm211 = vcmask 1043456
  %v213 = vsel %vm211, %v176, 0
  %215 = vmatprep.subr.mxu0 0.0
  %216 = vmatpush1.msra.mxu0 %v166
  %217 = vmatprep.subr.mxu0 0.0
  %218 = vmatpush1.msra.mxu0 %v171
  %219 = vmatprep.subr.mxu0 0.0
  %220 = vmatpush1.msra.mxu0 %v213
  %221 = vmatprep.subr.mxu0 0.0
  %222 = vmatpush1.msra.mxu0 0.0
  %223 = vmatprep.subr.mxu0 0.0
  %224 = vmatpush1.msra.mxu0 0.0
  %225 = vmatprep.subr.mxu0 0.0
  %226 = vmatpush1.msra.mxu0 0.0
  %227 = vmatprep.subr.mxu0 0.0
  %228 = vmatpush1.msra.mxu0 0.0
  %229 = vmatprep.subr.mxu0 0.0
  %230 = vmatpush1.msra.mxu0 0.0
  %231 = vmatprep.subr.mxu0 0.0
  %232 = vmatpush1.msra.mxu0 0.0
  %233 = vmatprep.subr.mxu0 0.0
  %234 = vmatpush1.msra.mxu0 0.0
  %235 = vmatprep.subr.mxu0 0.0
  %236 = vmatpush1.msra.mxu0 0.0
  %237 = vmatprep.subr.mxu0 0.0
  %238 = vmatpush1.msra.mxu0 0.0
  %239 = vmatprep.subr.mxu0 0.0
  %240 = vmatpush1.msra.mxu0 0.0
  %241 = vmatprep.subr.mxu0 0.0
  %242 = vmatpush1.msra.mxu0 0.0
  %243 = vmatprep.subr.mxu0 0.0
  %244 = vmatpush1.msra.mxu0 0.0
  %245 = vmatprep.subr.mxu0 0.0
  %246 = vmatpush1.msra.mxu0 0.0
  %247 = vmatprep.subr.mxu0 0.0
  %248 = vmatpush1.msra.mxu0 0.0
  %249 = vmatprep.subr.mxu0 0.0
  %250 = vmatpush1.msra.mxu0 0.0
  %251 = vmatprep.subr.mxu0 0.0
  %252 = vmatpush1.msra.mxu0 0.0
  %253 = vmatprep.subr.mxu0 0.0
  %254 = vmatpush1.msra.mxu0 0.0
  %255 = vmatprep.subr.mxu0 0.0
  %256 = vmatpush1.msra.mxu0 0.0
  %257 = vmatprep.subr.mxu0 0.0
  %258 = vmatpush1.msra.mxu0 0.0
  %259 = vmatprep.subr.mxu0 0.0
  %260 = vmatpush1.msra.mxu0 0.0
  %261 = vmatprep.subr.mxu0 0.0
  %262 = vmatpush1.msra.mxu0 0.0
  %263 = vmatprep.subr.mxu0 0.0
  %264 = vmatpush1.msra.mxu0 0.0
  %265 = vmatprep.subr.mxu0 0.0
  %266 = vmatpush1.msra.mxu0 0.0
  %267 = vmatprep.subr.mxu0 0.0
  %268 = vmatpush1.msra.mxu0 0.0
  %269 = vmatprep.subr.mxu0 0.0
  %270 = vmatpush1.msra.mxu0 0.0
  %271 = vmatprep.subr.mxu0 0.0
  %272 = vmatpush1.msra.mxu0 0.0
  %273 = vmatprep.subr.mxu0 0.0
  %274 = vmatpush1.msra.mxu0 0.0
  %275 = vmatprep.subr.mxu0 0.0
  %276 = vmatpush1.msra.mxu0 0.0
  %277 = vmatprep.subr.mxu0 0.0
  %278 = vmatpush1.msra.mxu0 0.0
  %279 = vmatprep.mubr.f32.mxu0 0.0
  %280 = vmatmul.mubr.f32.gmra.mrb[0].mxu0 %v188
  %v281 = vpop.f32.mrb[0].mxu0
  %v282 = vadd.f32 %v184, %v281
  %v283 = vpop.f32.mrb[0].mxu0
  %284 = vmatprep.mubr.f32.mxu0 0.0
  %285 = vmatmul.mubr.f32.gmra.mrb[0].mxu0 %v191
  %v286 = vpop.f32.mrb[0].mxu0
  %v287 = vadd.f32 %v184, %v286
  %v288 = vpop.f32.mrb[0].mxu0
  %289 = vmatprep.mubr.f32.mxu0 0.0
  %290 = vmatmul.mubr.f32.gmra.mrb[0].mxu0 %v194
  %v291 = vpop.f32.mrb[0].mxu0
  %v292 = vadd.f32 %v184, %v291
  %v293 = vpop.f32.mrb[0].mxu0
  %294 = vmatprep.mubr.f32.mxu0 0.0
  %295 = vmatmul.mubr.f32.gmra.mrb[0].mxu0 %v197
  %v296 = vpop.f32.mrb[0].mxu0
  %v297 = vadd.f32 %v184, %v296
  %v298 = vpop.f32.mrb[0].mxu0
  %299 = vmatprep.mubr.f32.mxu0 0.0
  %300 = vmatmul.mubr.f32.gmra.mrb[0].mxu0 %v200
  %v301 = vpop.f32.mrb[0].mxu0
  %v302 = vadd.f32 %v184, %v301
  %v303 = vpop.f32.mrb[0].mxu0
  %304 = vmatprep.mubr.f32.mxu0 0.0
  %305 = vmatmul.mubr.f32.gmra.mrb[0].mxu0 %v203
  %v306 = vpop.f32.mrb[0].mxu0
  %v307 = vadd.f32 %v184, %v306
  %v308 = vpop.f32.mrb[0].mxu0
  %309 = vmatprep.mubr.f32.mxu0 0.0
  %310 = vmatmul.mubr.f32.gmra.mrb[0].mxu0 %v206
  %v311 = vpop.f32.mrb[0].mxu0
  %v312 = vadd.f32 %v184, %v311
  %v313 = vpop.f32.mrb[0].mxu0
  %314 = vmatprep.mubr.f32.mxu0 0.0
  %315 = vmatmul.mubr.f32.gmra.mrb[0].mxu0 %v209
  %v316 = vpop.f32.mrb[0].mxu0
  %v317 = vadd.f32 %v184, %v316
  %v318 = vpop.f32.mrb[0].mxu0
  %319 = vdwg.mxu0
  %v320 = vld [vmem:[%s3] sm:$0xff]
  %v321 = vld [vmem:[%s3 + $0x8] sm:$0xff]
  %v322 = vld [vmem:[%s3 + $0x10] sm:$0xff]
  %v323 = vld [vmem:[%s3 + $0x18] sm:$0xff]
  %vm324 = vcmask 261120
  %v326 = vsel %vm324, 0.0, 0
  %328 = vmatprep.subr.mxu0 0.0
  %329 = vmatpush1.msra.mxu0 %v320
  %330 = vmatprep.subr.mxu0 0.0
  %331 = vmatpush1.msra.mxu0 %v321
  %332 = vmatprep.subr.mxu0 0.0
  %333 = vmatpush1.msra.mxu0 %v322
  %334 = vmatprep.subr.mxu0 0.0
  %335 = vmatpush1.msra.mxu0 %v323
  %336 = vmatprep.subr.mxu0 0.0
  %337 = vmatpush1.msra.mxu0 0.0
  %338 = vmatprep.subr.mxu0 0.0
  %339 = vmatpush1.msra.mxu0 0.0
  %340 = vmatprep.subr.mxu0 0.0
  %341 = vmatpush1.msra.mxu0 0.0
  %342 = vmatprep.subr.mxu0 0.0
  %343 = vmatpush1.msra.mxu0 0.0
  %344 = vmatprep.subr.mxu0 0.0
  %345 = vmatpush1.msra.mxu0 0.0
  %346 = vmatprep.subr.mxu0 0.0
  %347 = vmatpush1.msra.mxu0 0.0
  %348 = vmatprep.subr.mxu0 0.0
  %349 = vmatpush1.msra.mxu0 0.0
  %350 = vmatprep.subr.mxu0 0.0
  %351 = vmatpush1.msra.mxu0 0.0
  %352 = vmatprep.subr.mxu0 0.0
  %353 = vmatpush1.msra.mxu0 0.0
  %354 = vmatprep.subr.mxu0 0.0
  %355 = vmatpush1.msra.mxu0 0.0
  %356 = vmatprep.subr.mxu0 0.0
  %357 = vmatpush1.msra.mxu0 0.0
  %358 = vmatprep.subr.mxu0 0.0
  %359 = vmatpush1.msra.mxu0 0.0
  %360 = vmatprep.subr.mxu0 0.0
  %361 = vmatpush1.msra.mxu0 0.0
  %362 = vmatprep.subr.mxu0 0.0
  %363 = vmatpush1.msra.mxu0 0.0
  %364 = vmatprep.subr.mxu0 0.0
  %365 = vmatpush1.msra.mxu0 0.0
  %366 = vmatprep.subr.mxu0 0.0
  %367 = vmatpush1.msra.mxu0 0.0
  %368 = vmatprep.subr.mxu0 0.0
  %369 = vmatpush1.msra.mxu0 0.0
  %370 = vmatprep.subr.mxu0 0.0
  %371 = vmatpush1.msra.mxu0 0.0
  %372 = vmatprep.subr.mxu0 0.0
  %373 = vmatpush1.msra.mxu0 0.0
  %374 = vmatprep.subr.mxu0 0.0
  %375 = vmatpush1.msra.mxu0 0.0
  %376 = vmatprep.subr.mxu0 0.0
  %377 = vmatpush1.msra.mxu0 0.0
  %378 = vmatprep.subr.mxu0 0.0
  %379 = vmatpush1.msra.mxu0 0.0
  %380 = vmatprep.subr.mxu0 0.0
  %381 = vmatpush1.msra.mxu0 0.0
  %382 = vmatprep.subr.mxu0 0.0
  %383 = vmatpush1.msra.mxu0 0.0
  %384 = vmatprep.subr.mxu0 0.0
  %385 = vmatpush1.msra.mxu0 0.0
  %386 = vmatprep.subr.mxu0 0.0
  %387 = vmatpush1.msra.mxu0 0.0
  %388 = vmatprep.subr.mxu0 0.0
  %389 = vmatpush1.msra.mxu0 0.0
  %390 = vmatprep.subr.mxu0 0.0
  %391 = vmatpush1.msra.mxu0 0.0
  %392 = vmatprep.mubr.f32.mxu0 0.0
  %393 = vmatmul.mubr.f32.gmra.mrb[0].mxu0 %v326
  %v394 = vpop.f32.mrb[0].mxu0
  %v395 = vadd.f32 0.0, %v394
  %v396 = vpop.f32.mrb[0].mxu0
  %397 = vdwg.mxu0
  %v398 = vadd.f32 %v282, %v395
  %v399 = vxor.u32 %v398, 2147483648
  %v400 = vmul.f32 %v399, 1.442695
  %v401 = vpow.pop %v400
  %v402 = vadd.f32 %v401, 1.0
  %v403 = vrcp.pop %v402
  %v404 = vmul.f32 1.0, %v403
  %v405 = vtanh.pop %v398
  %v406 = vmul.f32 %v404, 0.0
  %408 = vrot.lane.b32.xlu0 %v405, 64
  %v409 = vpop.permute.xlu0 %408
  %v411 = vmul.f32 %v404, %v409
  %413 = vrot.lane.b32.xlu0 %v411, 32
  %v414 = vpop.permute.xlu0 %413
  %v416 = vadd.f32 %v406, %v414
  %v417 = vtanh.pop %v416
  %419 = vrot.lane.b32.xlu0 %v417, 64
  %v420 = vpop.permute.xlu0 %419
  %v422 = vmul.f32 %v404, %v420
  %424 = vrot.lane.b32.xlu0 %v422, 32
  %v425 = vpop.permute.xlu0 %424
  %v426 = vsel %vm324, %v425, 0
  %428 = vmatprep.subr.mxu0 0.0
  %429 = vmatpush1.msra.mxu0 %v320
  %430 = vmatprep.subr.mxu0 0.0
  %431 = vmatpush1.msra.mxu0 %v321
  %432 = vmatprep.subr.mxu0 0.0
  %433 = vmatpush1.msra.mxu0 %v322
  %434 = vmatprep.subr.mxu0 0.0
  %435 = vmatpush1.msra.mxu0 %v323
  %436 = vmatprep.subr.mxu0 0.0
  %437 = vmatpush1.msra.mxu0 0.0
  %438 = vmatprep.subr.mxu0 0.0
  %439 = vmatpush1.msra.mxu0 0.0
  %440 = vmatprep.subr.mxu0 0.0
  %441 = vmatpush1.msra.mxu0 0.0
  %442 = vmatprep.subr.mxu0 0.0
  %443 = vmatpush1.msra.mxu0 0.0
  %444 = vmatprep.subr.mxu0 0.0
  %445 = vmatpush1.msra.mxu0 0.0
  %446 = vmatprep.subr.mxu0 0.0
  %447 = vmatpush1.msra.mxu0 0.0
  %448 = vmatprep.subr.mxu0 0.0
  %449 = vmatpush1.msra.mxu0 0.0
  %450 = vmatprep.subr.mxu0 0.0
  %451 = vmatpush1.msra.mxu0 0.0
  %452 = vmatprep.subr.mxu0 0.0
  %453 = vmatpush1.msra.mxu0 0.0
  %454 = vmatprep.subr.mxu0 0.0
  %455 = vmatpush1.msra.mxu0 0.0
  %456 = vmatprep.subr.mxu0 0.0
  %457 = vmatpush1.msra.mxu0 0.0
  %458 = vmatprep.subr.mxu0 0.0
  %459 = vmatpush1.msra.mxu0 0.0
  %460 = vmatprep.subr.mxu0 0.0
  %461 = vmatpush1.msra.mxu0 0.0
  %462 = vmatprep.subr.mxu0 0.0
  %463 = vmatpush1.msra.mxu0 0.0
  %464 = vmatprep.subr.mxu0 0.0
  %465 = vmatpush1.msra.mxu0 0.0
  %466 = vmatprep.subr.mxu0 0.0
  %467 = vmatpush1.msra.mxu0 0.0
  %468 = vmatprep.subr.mxu0 0.0
  %469 = vmatpush1.msra.mxu0 0.0
  %470 = vmatprep.subr.mxu0 0.0
  %471 = vmatpush1.msra.mxu0 0.0
  %472 = vmatprep.subr.mxu0 0.0
  %473 = vmatpush1.msra.mxu0 0.0
  %474 = vmatprep.subr.mxu0 0.0
  %475 = vmatpush1.msra.mxu0 0.0
  %476 = vmatprep.subr.mxu0 0.0
  %477 = vmatpush1.msra.mxu0 0.0
  %478 = vmatprep.subr.mxu0 0.0
  %479 = vmatpush1.msra.mxu0 0.0
  %480 = vmatprep.subr.mxu0 0.0
  %481 = vmatpush1.msra.mxu0 0.0
  %482 = vmatprep.subr.mxu0 0.0
  %483 = vmatpush1.msra.mxu0 0.0
  %484 = vmatprep.subr.mxu0 0.0
  %485 = vmatpush1.msra.mxu0 0.0
  %486 = vmatprep.subr.mxu0 0.0
  %487 = vmatpush1.msra.mxu0 0.0
  %488 = vmatprep.subr.mxu0 0.0
  %489 = vmatpush1.msra.mxu0 0.0
  %490 = vmatprep.subr.mxu0 0.0
  %491 = vmatpush1.msra.mxu0 0.0
  %492 = vmatprep.mubr.f32.mxu0 0.0
  %493 = vmatmul.mubr.f32.gmra.mrb[0].mxu0 %v426
  %v494 = vpop.f32.mrb[0].mxu0
  %v495 = vadd.f32 0.0, %v494
  %v496 = vpop.f32.mrb[0].mxu0
  %497 = vdwg.mxu0
  %v498 = vadd.f32 %v287, %v495
  %v499 = vxor.u32 %v498, 2147483648
  %v500 = vmul.f32 %v499, 1.442695
  %v501 = vpow.pop %v500
  %v502 = vadd.f32 %v501, 1.0
  %v503 = vrcp.pop %v502
  %v504 = vmul.f32 1.0, %v503
  %v505 = vtanh.pop %v498
  %v506 = vmul.f32 %v504, %v416
  %508 = vrot.lane.b32.xlu0 %v505, 64
  %v509 = vpop.permute.xlu0 %508
  %v511 = vmul.f32 %v504, %v509
  %513 = vrot.lane.b32.xlu0 %v511, 32
  %v514 = vpop.permute.xlu0 %513
  %v516 = vadd.f32 %v506, %v514
  %v517 = vtanh.pop %v516
  %519 = vrot.lane.b32.xlu0 %v517, 64
  %v520 = vpop.permute.xlu0 %519
  %v522 = vmul.f32 %v504, %v520
  %524 = vrot.lane.b32.xlu0 %v522, 32
  %v525 = vpop.permute.xlu0 %524
  %v526 = vsel %vm324, %v525, 0
  %528 = vmatprep.subr.mxu0 0.0
  %529 = vmatpush1.msra.mxu0 %v320
  %530 = vmatprep.subr.mxu0 0.0
  %531 = vmatpush1.msra.mxu0 %v321
  %532 = vmatprep.subr.mxu0 0.0
  %533 = vmatpush1.msra.mxu0 %v322
  %534 = vmatprep.subr.mxu0 0.0
  %535 = vmatpush1.msra.mxu0 %v323
  %536 = vmatprep.subr.mxu0 0.0
  %537 = vmatpush1.msra.mxu0 0.0
  %538 = vmatprep.subr.mxu0 0.0
  %539 = vmatpush1.msra.mxu0 0.0
  %540 = vmatprep.subr.mxu0 0.0
  %541 = vmatpush1.msra.mxu0 0.0
  %542 = vmatprep.subr.mxu0 0.0
  %543 = vmatpush1.msra.mxu0 0.0
  %544 = vmatprep.subr.mxu0 0.0
  %545 = vmatpush1.msra.mxu0 0.0
  %546 = vmatprep.subr.mxu0 0.0
  %547 = vmatpush1.msra.mxu0 0.0
  %548 = vmatprep.subr.mxu0 0.0
  %549 = vmatpush1.msra.mxu0 0.0
  %550 = vmatprep.subr.mxu0 0.0
  %551 = vmatpush1.msra.mxu0 0.0
  %552 = vmatprep.subr.mxu0 0.0
  %553 = vmatpush1.msra.mxu0 0.0
  %554 = vmatprep.subr.mxu0 0.0
  %555 = vmatpush1.msra.mxu0 0.0
  %556 = vmatprep.subr.mxu0 0.0
  %557 = vmatpush1.msra.mxu0 0.0
  %558 = vmatprep.subr.mxu0 0.0
  %559 = vmatpush1.msra.mxu0 0.0
  %560 = vmatprep.subr.mxu0 0.0
  %561 = vmatpush1.msra.mxu0 0.0
  %562 = vmatprep.subr.mxu0 0.0
  %563 = vmatpush1.msra.mxu0 0.0
  %564 = vmatprep.subr.mxu0 0.0
  %565 = vmatpush1.msra.mxu0 0.0
  %566 = vmatprep.subr.mxu0 0.0
  %567 = vmatpush1.msra.mxu0 0.0
  %568 = vmatprep.subr.mxu0 0.0
  %569 = vmatpush1.msra.mxu0 0.0
  %570 = vmatprep.subr.mxu0 0.0
  %571 = vmatpush1.msra.mxu0 0.0
  %572 = vmatprep.subr.mxu0 0.0
  %573 = vmatpush1.msra.mxu0 0.0
  %574 = vmatprep.subr.mxu0 0.0
  %575 = vmatpush1.msra.mxu0 0.0
  %576 = vmatprep.subr.mxu0 0.0
  %577 = vmatpush1.msra.mxu0 0.0
  %578 = vmatprep.subr.mxu0 0.0
  %579 = vmatpush1.msra.mxu0 0.0
  %580 = vmatprep.subr.mxu0 0.0
  %581 = vmatpush1.msra.mxu0 0.0
  %582 = vmatprep.subr.mxu0 0.0
  %583 = vmatpush1.msra.mxu0 0.0
  %584 = vmatprep.subr.mxu0 0.0
  %585 = vmatpush1.msra.mxu0 0.0
  %586 = vmatprep.subr.mxu0 0.0
  %587 = vmatpush1.msra.mxu0 0.0
  %588 = vmatprep.subr.mxu0 0.0
  %589 = vmatpush1.msra.mxu0 0.0
  %590 = vmatprep.subr.mxu0 0.0
  %591 = vmatpush1.msra.mxu0 0.0
  %592 = vmatprep.mubr.f32.mxu0 0.0
  %593 = vmatmul.mubr.f32.gmra.mrb[0].mxu0 %v526
  %v594 = vpop.f32.mrb[0].mxu0
  %v595 = vadd.f32 0.0, %v594
  %v596 = vpop.f32.mrb[0].mxu0
  %597 = vdwg.mxu0
  %v598 = vadd.f32 %v292, %v595
  %v599 = vxor.u32 %v598, 2147483648
  %v600 = vmul.f32 %v599, 1.442695
  %v601 = vpow.pop %v600
  %v602 = vadd.f32 %v601, 1.0
  %v603 = vrcp.pop %v602
  %v604 = vmul.f32 1.0, %v603
  %v605 = vtanh.pop %v598
  %v606 = vmul.f32 %v604, %v516
  %608 = vrot.lane.b32.xlu0 %v605, 64
  %v609 = vpop.permute.xlu0 %608
  %v611 = vmul.f32 %v604, %v609
  %613 = vrot.lane.b32.xlu0 %v611, 32
  %v614 = vpop.permute.xlu0 %613
  %v616 = vadd.f32 %v606, %v614
  %v617 = vtanh.pop %v616
  %619 = vrot.lane.b32.xlu0 %v617, 64
  %v620 = vpop.permute.xlu0 %619
  %v622 = vmul.f32 %v604, %v620
  %624 = vrot.lane.b32.xlu0 %v622, 32
  %v625 = vpop.permute.xlu0 %624
  %v626 = vsel %vm324, %v625, 0
  %628 = vmatprep.subr.mxu0 0.0
  %629 = vmatpush1.msra.mxu0 %v320
  %630 = vmatprep.subr.mxu0 0.0
  %631 = vmatpush1.msra.mxu0 %v321
  %632 = vmatprep.subr.mxu0 0.0
  %633 = vmatpush1.msra.mxu0 %v322
  %634 = vmatprep.subr.mxu0 0.0
  %635 = vmatpush1.msra.mxu0 %v323
  %636 = vmatprep.subr.mxu0 0.0
  %637 = vmatpush1.msra.mxu0 0.0
  %638 = vmatprep.subr.mxu0 0.0
  %639 = vmatpush1.msra.mxu0 0.0
  %640 = vmatprep.subr.mxu0 0.0
  %641 = vmatpush1.msra.mxu0 0.0
  %642 = vmatprep.subr.mxu0 0.0
  %643 = vmatpush1.msra.mxu0 0.0
  %644 = vmatprep.subr.mxu0 0.0
  %645 = vmatpush1.msra.mxu0 0.0
  %646 = vmatprep.subr.mxu0 0.0
  %647 = vmatpush1.msra.mxu0 0.0
  %648 = vmatprep.subr.mxu0 0.0
  %649 = vmatpush1.msra.mxu0 0.0
  %650 = vmatprep.subr.mxu0 0.0
  %651 = vmatpush1.msra.mxu0 0.0
  %652 = vmatprep.subr.mxu0 0.0
  %653 = vmatpush1.msra.mxu0 0.0
  %654 = vmatprep.subr.mxu0 0.0
  %655 = vmatpush1.msra.mxu0 0.0
  %656 = vmatprep.subr.mxu0 0.0
  %657 = vmatpush1.msra.mxu0 0.0
  %658 = vmatprep.subr.mxu0 0.0
  %659 = vmatpush1.msra.mxu0 0.0
  %660 = vmatprep.subr.mxu0 0.0
  %661 = vmatpush1.msra.mxu0 0.0
  %662 = vmatprep.subr.mxu0 0.0
  %663 = vmatpush1.msra.mxu0 0.0
  %664 = vmatprep.subr.mxu0 0.0
  %665 = vmatpush1.msra.mxu0 0.0
  %666 = vmatprep.subr.mxu0 0.0
  %667 = vmatpush1.msra.mxu0 0.0
  %668 = vmatprep.subr.mxu0 0.0
  %669 = vmatpush1.msra.mxu0 0.0
  %670 = vmatprep.subr.mxu0 0.0
  %671 = vmatpush1.msra.mxu0 0.0
  %672 = vmatprep.subr.mxu0 0.0
  %673 = vmatpush1.msra.mxu0 0.0
  %674 = vmatprep.subr.mxu0 0.0
  %675 = vmatpush1.msra.mxu0 0.0
  %676 = vmatprep.subr.mxu0 0.0
  %677 = vmatpush1.msra.mxu0 0.0
  %678 = vmatprep.subr.mxu0 0.0
  %679 = vmatpush1.msra.mxu0 0.0
  %680 = vmatprep.subr.mxu0 0.0
  %681 = vmatpush1.msra.mxu0 0.0
  %682 = vmatprep.subr.mxu0 0.0
  %683 = vmatpush1.msra.mxu0 0.0
  %684 = vmatprep.subr.mxu0 0.0
  %685 = vmatpush1.msra.mxu0 0.0
  %686 = vmatprep.subr.mxu0 0.0
  %687 = vmatpush1.msra.mxu0 0.0
  %688 = vmatprep.subr.mxu0 0.0
  %689 = vmatpush1.msra.mxu0 0.0
  %690 = vmatprep.subr.mxu0 0.0
  %691 = vmatpush1.msra.mxu0 0.0
  %692 = vmatprep.mubr.f32.mxu0 0.0
  %693 = vmatmul.mubr.f32.gmra.mrb[0].mxu0 %v626
  %v694 = vpop.f32.mrb[0].mxu0
  %v695 = vadd.f32 0.0, %v694
  %v696 = vpop.f32.mrb[0].mxu0
  %697 = vdwg.mxu0
  %v698 = vadd.f32 %v297, %v695
  %v699 = vxor.u32 %v698, 2147483648
  %v700 = vmul.f32 %v699, 1.442695
  %v701 = vpow.pop %v700
  %v702 = vadd.f32 %v701, 1.0
  %v703 = vrcp.pop %v702
  %v704 = vmul.f32 1.0, %v703
  %v705 = vtanh.pop %v698
  %v706 = vmul.f32 %v704, %v616
  %708 = vrot.lane.b32.xlu0 %v705, 64
  %v709 = vpop.permute.xlu0 %708
  %v711 = vmul.f32 %v704, %v709
  %713 = vrot.lane.b32.xlu0 %v711, 32
  %v714 = vpop.permute.xlu0 %713
  %v716 = vadd.f32 %v706, %v714
  %v717 = vtanh.pop %v716
  %719 = vrot.lane.b32.xlu0 %v717, 64
  %v720 = vpop.permute.xlu0 %719
  %v722 = vmul.f32 %v704, %v720
  %724 = vrot.lane.b32.xlu0 %v722, 32
  %v725 = vpop.permute.xlu0 %724
  %v726 = vsel %vm324, %v725, 0
  %728 = vmatprep.subr.mxu0 0.0
  %729 = vmatpush1.msra.mxu0 %v320
  %730 = vmatprep.subr.mxu0 0.0
  %731 = vmatpush1.msra.mxu0 %v321
  %732 = vmatprep.subr.mxu0 0.0
  %733 = vmatpush1.msra.mxu0 %v322
  %734 = vmatprep.subr.mxu0 0.0
  %735 = vmatpush1.msra.mxu0 %v323
  %736 = vmatprep.subr.mxu0 0.0
  %737 = vmatpush1.msra.mxu0 0.0
  %738 = vmatprep.subr.mxu0 0.0
  %739 = vmatpush1.msra.mxu0 0.0
  %740 = vmatprep.subr.mxu0 0.0
  %741 = vmatpush1.msra.mxu0 0.0
  %742 = vmatprep.subr.mxu0 0.0
  %743 = vmatpush1.msra.mxu0 0.0
  %744 = vmatprep.subr.mxu0 0.0
  %745 = vmatpush1.msra.mxu0 0.0
  %746 = vmatprep.subr.mxu0 0.0
  %747 = vmatpush1.msra.mxu0 0.0
  %748 = vmatprep.subr.mxu0 0.0
  %749 = vmatpush1.msra.mxu0 0.0
  %750 = vmatprep.subr.mxu0 0.0
  %751 = vmatpush1.msra.mxu0 0.0
  %752 = vmatprep.subr.mxu0 0.0
  %753 = vmatpush1.msra.mxu0 0.0
  %754 = vmatprep.subr.mxu0 0.0
  %755 = vmatpush1.msra.mxu0 0.0
  %756 = vmatprep.subr.mxu0 0.0
  %757 = vmatpush1.msra.mxu0 0.0
  %758 = vmatprep.subr.mxu0 0.0
  %759 = vmatpush1.msra.mxu0 0.0
  %760 = vmatprep.subr.mxu0 0.0
  %761 = vmatpush1.msra.mxu0 0.0
  %762 = vmatprep.subr.mxu0 0.0
  %763 = vmatpush1.msra.mxu0 0.0
  %764 = vmatprep.subr.mxu0 0.0
  %765 = vmatpush1.msra.mxu0 0.0
  %766 = vmatprep.subr.mxu0 0.0
  %767 = vmatpush1.msra.mxu0 0.0
  %768 = vmatprep.subr.mxu0 0.0
  %769 = vmatpush1.msra.mxu0 0.0
  %770 = vmatprep.subr.mxu0 0.0
  %771 = vmatpush1.msra.mxu0 0.0
  %772 = vmatprep.subr.mxu0 0.0
  %773 = vmatpush1.msra.mxu0 0.0
  %774 = vmatprep.subr.mxu0 0.0
  %775 = vmatpush1.msra.mxu0 0.0
  %776 = vmatprep.subr.mxu0 0.0
  %777 = vmatpush1.msra.mxu0 0.0
  %778 = vmatprep.subr.mxu0 0.0
  %779 = vmatpush1.msra.mxu0 0.0
  %780 = vmatprep.subr.mxu0 0.0
  %781 = vmatpush1.msra.mxu0 0.0
  %782 = vmatprep.subr.mxu0 0.0
  %783 = vmatpush1.msra.mxu0 0.0
  %784 = vmatprep.subr.mxu0 0.0
  %785 = vmatpush1.msra.mxu0 0.0
  %786 = vmatprep.subr.mxu0 0.0
  %787 = vmatpush1.msra.mxu0 0.0
  %788 = vmatprep.subr.mxu0 0.0
  %789 = vmatpush1.msra.mxu0 0.0
  %790 = vmatprep.subr.mxu0 0.0
  %791 = vmatpush1.msra.mxu0 0.0
  %792 = vmatprep.mubr.f32.mxu0 0.0
  %793 = vmatmul.mubr.f32.gmra.mrb[0].mxu0 %v726
  %v794 = vpop.f32.mrb[0].mxu0
  %v795 = vadd.f32 0.0, %v794
  %v796 = vpop.f32.mrb[0].mxu0
  %797 = vdwg.mxu0
  %v798 = vadd.f32 %v302, %v795
  %v799 = vxor.u32 %v798, 2147483648
  %v800 = vmul.f32 %v799, 1.442695
  %v801 = vpow.pop %v800
  %v802 = vadd.f32 %v801, 1.0
  %v803 = vrcp.pop %v802
  %v804 = vmul.f32 1.0, %v803
  %v805 = vtanh.pop %v798
  %v806 = vmul.f32 %v804, %v716
  %808 = vrot.lane.b32.xlu0 %v805, 64
  %v809 = vpop.permute.xlu0 %808
  %v811 = vmul.f32 %v804, %v809
  %813 = vrot.lane.b32.xlu0 %v811, 32
  %v814 = vpop.permute.xlu0 %813
  %v816 = vadd.f32 %v806, %v814
  %v817 = vtanh.pop %v816
  %819 = vrot.lane.b32.xlu0 %v817, 64
  %v820 = vpop.permute.xlu0 %819
  %v822 = vmul.f32 %v804, %v820
  %824 = vrot.lane.b32.xlu0 %v822, 32
  %v825 = vpop.permute.xlu0 %824
  %v826 = vsel %vm324, %v825, 0
  %828 = vmatprep.subr.mxu0 0.0
  %829 = vmatpush1.msra.mxu0 %v320
  %830 = vmatprep.subr.mxu0 0.0
  %831 = vmatpush1.msra.mxu0 %v321
  %832 = vmatprep.subr.mxu0 0.0
  %833 = vmatpush1.msra.mxu0 %v322
  %834 = vmatprep.subr.mxu0 0.0
  %835 = vmatpush1.msra.mxu0 %v323
  %836 = vmatprep.subr.mxu0 0.0
  %837 = vmatpush1.msra.mxu0 0.0
  %838 = vmatprep.subr.mxu0 0.0
  %839 = vmatpush1.msra.mxu0 0.0
  %840 = vmatprep.subr.mxu0 0.0
  %841 = vmatpush1.msra.mxu0 0.0
  %842 = vmatprep.subr.mxu0 0.0
  %843 = vmatpush1.msra.mxu0 0.0
  %844 = vmatprep.subr.mxu0 0.0
  %845 = vmatpush1.msra.mxu0 0.0
  %846 = vmatprep.subr.mxu0 0.0
  %847 = vmatpush1.msra.mxu0 0.0
  %848 = vmatprep.subr.mxu0 0.0
  %849 = vmatpush1.msra.mxu0 0.0
  %850 = vmatprep.subr.mxu0 0.0
  %851 = vmatpush1.msra.mxu0 0.0
  %852 = vmatprep.subr.mxu0 0.0
  %853 = vmatpush1.msra.mxu0 0.0
  %854 = vmatprep.subr.mxu0 0.0
  %855 = vmatpush1.msra.mxu0 0.0
  %856 = vmatprep.subr.mxu0 0.0
  %857 = vmatpush1.msra.mxu0 0.0
  %858 = vmatprep.subr.mxu0 0.0
  %859 = vmatpush1.msra.mxu0 0.0
  %860 = vmatprep.subr.mxu0 0.0
  %861 = vmatpush1.msra.mxu0 0.0
  %862 = vmatprep.subr.mxu0 0.0
  %863 = vmatpush1.msra.mxu0 0.0
  %864 = vmatprep.subr.mxu0 0.0
  %865 = vmatpush1.msra.mxu0 0.0
  %866 = vmatprep.subr.mxu0 0.0
  %867 = vmatpush1.msra.mxu0 0.0
  %868 = vmatprep.subr.mxu0 0.0
  %869 = vmatpush1.msra.mxu0 0.0
  %870 = vmatprep.subr.mxu0 0.0
  %871 = vmatpush1.msra.mxu0 0.0
  %872 = vmatprep.subr.mxu0 0.0
  %873 = vmatpush1.msra.mxu0 0.0
  %874 = vmatprep.subr.mxu0 0.0
  %875 = vmatpush1.msra.mxu0 0.0
  %876 = vmatprep.subr.mxu0 0.0
  %877 = vmatpush1.msra.mxu0 0.0
  %878 = vmatprep.subr.mxu0 0.0
  %879 = vmatpush1.msra.mxu0 0.0
  %880 = vmatprep.subr.mxu0 0.0
  %881 = vmatpush1.msra.mxu0 0.0
  %882 = vmatprep.subr.mxu0 0.0
  %883 = vmatpush1.msra.mxu0 0.0
  %884 = vmatprep.subr.mxu0 0.0
  %885 = vmatpush1.msra.mxu0 0.0
  %886 = vmatprep.subr.mxu0 0.0
  %887 = vmatpush1.msra.mxu0 0.0
  %888 = vmatprep.subr.mxu0 0.0
  %889 = vmatpush1.msra.mxu0 0.0
  %890 = vmatprep.subr.mxu0 0.0
  %891 = vmatpush1.msra.mxu0 0.0
  %892 = vmatprep.mubr.f32.mxu0 0.0
  %893 = vmatmul.mubr.f32.gmra.mrb[0].mxu0 %v826
  %v894 = vpop.f32.mrb[0].mxu0
  %v895 = vadd.f32 0.0, %v894
  %v896 = vpop.f32.mrb[0].mxu0
  %897 = vdwg.mxu0
  %v898 = vadd.f32 %v307, %v895
  %v899 = vxor.u32 %v898, 2147483648
  %v900 = vmul.f32 %v899, 1.442695
  %v901 = vpow.pop %v900
  %v902 = vadd.f32 %v901, 1.0
  %v903 = vrcp.pop %v902
  %v904 = vmul.f32 1.0, %v903
  %v905 = vtanh.pop %v898
  %v906 = vmul.f32 %v904, %v816
  %908 = vrot.lane.b32.xlu0 %v905, 64
  %v909 = vpop.permute.xlu0 %908
  %v911 = vmul.f32 %v904, %v909
  %913 = vrot.lane.b32.xlu0 %v911, 32
  %v914 = vpop.permute.xlu0 %913
  %v916 = vadd.f32 %v906, %v914
  %v917 = vtanh.pop %v916
  %919 = vrot.lane.b32.xlu0 %v917, 64
  %v920 = vpop.permute.xlu0 %919
  %v922 = vmul.f32 %v904, %v920
  %924 = vrot.lane.b32.xlu0 %v922, 32
  %v925 = vpop.permute.xlu0 %924
  %v926 = vsel %vm324, %v925, 0
  %928 = vmatprep.subr.mxu0 0.0
  %929 = vmatpush1.msra.mxu0 %v320
  %930 = vmatprep.subr.mxu0 0.0
  %931 = vmatpush1.msra.mxu0 %v321
  %932 = vmatprep.subr.mxu0 0.0
  %933 = vmatpush1.msra.mxu0 %v322
  %934 = vmatprep.subr.mxu0 0.0
  %935 = vmatpush1.msra.mxu0 %v323
  %936 = vmatprep.subr.mxu0 0.0
  %937 = vmatpush1.msra.mxu0 0.0
  %938 = vmatprep.subr.mxu0 0.0
  %939 = vmatpush1.msra.mxu0 0.0
  %940 = vmatprep.subr.mxu0 0.0
  %941 = vmatpush1.msra.mxu0 0.0
  %942 = vmatprep.subr.mxu0 0.0
  %943 = vmatpush1.msra.mxu0 0.0
  %944 = vmatprep.subr.mxu0 0.0
  %945 = vmatpush1.msra.mxu0 0.0
  %946 = vmatprep.subr.mxu0 0.0
  %947 = vmatpush1.msra.mxu0 0.0
  %948 = vmatprep.subr.mxu0 0.0
  %949 = vmatpush1.msra.mxu0 0.0
  %950 = vmatprep.subr.mxu0 0.0
  %951 = vmatpush1.msra.mxu0 0.0
  %952 = vmatprep.subr.mxu0 0.0
  %953 = vmatpush1.msra.mxu0 0.0
  %954 = vmatprep.subr.mxu0 0.0
  %955 = vmatpush1.msra.mxu0 0.0
  %956 = vmatprep.subr.mxu0 0.0
  %957 = vmatpush1.msra.mxu0 0.0
  %958 = vmatprep.subr.mxu0 0.0
  %959 = vmatpush1.msra.mxu0 0.0
  %960 = vmatprep.subr.mxu0 0.0
  %961 = vmatpush1.msra.mxu0 0.0
  %962 = vmatprep.subr.mxu0 0.0
  %963 = vmatpush1.msra.mxu0 0.0
  %964 = vmatprep.subr.mxu0 0.0
  %965 = vmatpush1.msra.mxu0 0.0
  %966 = vmatprep.subr.mxu0 0.0
  %967 = vmatpush1.msra.mxu0 0.0
  %968 = vmatprep.subr.mxu0 0.0
  %969 = vmatpush1.msra.mxu0 0.0
  %970 = vmatprep.subr.mxu0 0.0
  %971 = vmatpush1.msra.mxu0 0.0
  %972 = vmatprep.subr.mxu0 0.0
  %973 = vmatpush1.msra.mxu0 0.0
  %974 = vmatprep.subr.mxu0 0.0
  %975 = vmatpush1.msra.mxu0 0.0
  %976 = vmatprep.subr.mxu0 0.0
  %977 = vmatpush1.msra.mxu0 0.0
  %978 = vmatprep.subr.mxu0 0.0
  %979 = vmatpush1.msra.mxu0 0.0
  %980 = vmatprep.subr.mxu0 0.0
  %981 = vmatpush1.msra.mxu0 0.0
  %982 = vmatprep.subr.mxu0 0.0
  %983 = vmatpush1.msra.mxu0 0.0
  %984 = vmatprep.subr.mxu0 0.0
  %985 = vmatpush1.msra.mxu0 0.0
  %986 = vmatprep.subr.mxu0 0.0
  %987 = vmatpush1.msra.mxu0 0.0
  %988 = vmatprep.subr.mxu0 0.0
  %989 = vmatpush1.msra.mxu0 0.0
  %990 = vmatprep.subr.mxu0 0.0
  %991 = vmatpush1.msra.mxu0 0.0
  %992 = vmatprep.mubr.f32.mxu0 0.0
  %993 = vmatmul.mubr.f32.gmra.mrb[0].mxu0 %v926
  %v994 = vpop.f32.mrb[0].mxu0
  %v995 = vadd.f32 0.0, %v994
  %v996 = vpop.f32.mrb[0].mxu0
  %997 = vdwg.mxu0
  %v998 = vadd.f32 %v312, %v995
  %v999 = vxor.u32 %v998, 2147483648
  %v1000 = vmul.f32 %v999, 1.442695
  %v1001 = vpow.pop %v1000
  %v1002 = vadd.f32 %v1001, 1.0
  %v1003 = vrcp.pop %v1002
  %v1004 = vmul.f32 1.0, %v1003
  %v1005 = vtanh.pop %v998
  %v1006 = vmul.f32 %v1004, %v916
  %1008 = vrot.lane.b32.xlu0 %v1005, 64
  %v1009 = vpop.permute.xlu0 %1008
  %v1011 = vmul.f32 %v1004, %v1009
  %1013 = vrot.lane.b32.xlu0 %v1011, 32
  %v1014 = vpop.permute.xlu0 %1013
  %v1016 = vadd.f32 %v1006, %v1014
  %v1017 = vtanh.pop %v1016
  %1019 = vrot.lane.b32.xlu0 %v1017, 64
  %v1020 = vpop.permute.xlu0 %1019
  %v1022 = vmul.f32 %v1004, %v1020
  %1024 = vrot.lane.b32.xlu0 %v1022, 32
  %v1025 = vpop.permute.xlu0 %1024
  %v1026 = vsel %vm324, %v1025, 0
  %1028 = vmatprep.subr.mxu0 0.0
  %1029 = vmatpush1.msra.mxu0 %v320
  %1030 = vmatprep.subr.mxu0 0.0
  %1031 = vmatpush1.msra.mxu0 %v321
  %1032 = vmatprep.subr.mxu0 0.0
  %1033 = vmatpush1.msra.mxu0 %v322
  %1034 = vmatprep.subr.mxu0 0.0
  %1035 = vmatpush1.msra.mxu0 %v323
  %1036 = vmatprep.subr.mxu0 0.0
  %1037 = vmatpush1.msra.mxu0 0.0
  %1038 = vmatprep.subr.mxu0 0.0
  %1039 = vmatpush1.msra.mxu0 0.0
  %1040 = vmatprep.subr.mxu0 0.0
  %1041 = vmatpush1.msra.mxu0 0.0
  %1042 = vmatprep.subr.mxu0 0.0
  %1043 = vmatpush1.msra.mxu0 0.0
  %1044 = vmatprep.subr.mxu0 0.0
  %1045 = vmatpush1.msra.mxu0 0.0
  %1046 = vmatprep.subr.mxu0 0.0
  %1047 = vmatpush1.msra.mxu0 0.0
  %1048 = vmatprep.subr.mxu0 0.0
  %1049 = vmatpush1.msra.mxu0 0.0
  %1050 = vmatprep.subr.mxu0 0.0
  %1051 = vmatpush1.msra.mxu0 0.0
  %1052 = vmatprep.subr.mxu0 0.0
  %1053 = vmatpush1.msra.mxu0 0.0
  %1054 = vmatprep.subr.mxu0 0.0
  %1055 = vmatpush1.msra.mxu0 0.0
  %1056 = vmatprep.subr.mxu0 0.0
  %1057 = vmatpush1.msra.mxu0 0.0
  %1058 = vmatprep.subr.mxu0 0.0
  %1059 = vmatpush1.msra.mxu0 0.0
  %1060 = vmatprep.subr.mxu0 0.0
  %1061 = vmatpush1.msra.mxu0 0.0
  %1062 = vmatprep.subr.mxu0 0.0
  %1063 = vmatpush1.msra.mxu0 0.0
  %1064 = vmatprep.subr.mxu0 0.0
  %1065 = vmatpush1.msra.mxu0 0.0
  %1066 = vmatprep.subr.mxu0 0.0
  %1067 = vmatpush1.msra.mxu0 0.0
  %1068 = vmatprep.subr.mxu0 0.0
  %1069 = vmatpush1.msra.mxu0 0.0
  %1070 = vmatprep.subr.mxu0 0.0
  %1071 = vmatpush1.msra.mxu0 0.0
  %1072 = vmatprep.subr.mxu0 0.0
  %1073 = vmatpush1.msra.mxu0 0.0
  %1074 = vmatprep.subr.mxu0 0.0
  %1075 = vmatpush1.msra.mxu0 0.0
  %1076 = vmatprep.subr.mxu0 0.0
  %1077 = vmatpush1.msra.mxu0 0.0
  %1078 = vmatprep.subr.mxu0 0.0
  %1079 = vmatpush1.msra.mxu0 0.0
  %1080 = vmatprep.subr.mxu0 0.0
  %1081 = vmatpush1.msra.mxu0 0.0
  %1082 = vmatprep.subr.mxu0 0.0
  %1083 = vmatpush1.msra.mxu0 0.0
  %1084 = vmatprep.subr.mxu0 0.0
  %1085 = vmatpush1.msra.mxu0 0.0
  %1086 = vmatprep.subr.mxu0 0.0
  %1087 = vmatpush1.msra.mxu0 0.0
  %1088 = vmatprep.subr.mxu0 0.0
  %1089 = vmatpush1.msra.mxu0 0.0
  %1090 = vmatprep.subr.mxu0 0.0
  %1091 = vmatpush1.msra.mxu0 0.0
  %1092 = vmatprep.mubr.f32.mxu0 0.0
  %1093 = vmatmul.mubr.f32.gmra.mrb[0].mxu0 %v1026
  %v1094 = vpop.f32.mrb[0].mxu0
  %v1095 = vadd.f32 0.0, %v1094
  %v1096 = vpop.f32.mrb[0].mxu0
  %1097 = vdwg.mxu0
  %v1098 = vadd.f32 %v317, %v1095
  %v1099 = vxor.u32 %v1098, 2147483648
  %v1100 = vmul.f32 %v1099, 1.442695
  %v1101 = vpow.pop %v1100
  %v1102 = vadd.f32 %v1101, 1.0
  %v1103 = vrcp.pop %v1102
  %v1104 = vmul.f32 1.0, %v1103
  %v1105 = vtanh.pop %v1098
  %v1106 = vmul.f32 %v1104, %v1016
  %1108 = vrot.lane.b32.xlu0 %v1105, 64
  %v1109 = vpop.permute.xlu0 %1108
  %v1111 = vmul.f32 %v1104, %v1109
  %1113 = vrot.lane.b32.xlu0 %v1111, 32
  %v1114 = vpop.permute.xlu0 %1113
  %v1116 = vadd.f32 %v1106, %v1114
  %v1117 = vtanh.pop %v1116
  %1119 = vrot.lane.b32.xlu0 %v1117, 64
  %v1120 = vpop.permute.xlu0 %1119
  %v1122 = vmul.f32 %v1104, %v1120
  %v1123 = vld [vmem:[%s5] sm:$0xff]
  %v1124 = vld [vmem:[%s5 + $0x8] sm:$0xff]
  %v1125 = vld [vmem:[%s5 + $0x10] sm:$0xff]
  %v1126 = vld [vmem:[%s5 + $0x18] sm:$0xff]
  %v1127 = vld [vmem:[%s6] sm:$0x1]
  %v1129 = vlaneseq
  %v1130 = vshrl.u32 %v1129, 7
  %v1131 = vsub.s32 0, %v1130
  %v1132 = vrot.slane %v1127, %v1131
  %1135 = vrot.lane.b32.xlu0 %v1122, 32
  %v1136 = vpop.permute.xlu0 %1135
  %v1137 = vsel %vm324, %v1136, 0
  %1139 = vmatprep.subr.mxu0 0.0
  %1140 = vmatpush1.msra.mxu0 %v1123
  %1141 = vmatprep.subr.mxu0 0.0
  %1142 = vmatpush1.msra.mxu0 %v1124
  %1143 = vmatprep.subr.mxu0 0.0
  %1144 = vmatpush1.msra.mxu0 %v1125
  %1145 = vmatprep.subr.mxu0 0.0
  %1146 = vmatpush1.msra.mxu0 %v1126
  %1147 = vmatprep.subr.mxu0 0.0
  %1148 = vmatpush1.msra.mxu0 0.0
  %1149 = vmatprep.subr.mxu0 0.0
  %1150 = vmatpush1.msra.mxu0 0.0
  %1151 = vmatprep.subr.mxu0 0.0
  %1152 = vmatpush1.msra.mxu0 0.0
  %1153 = vmatprep.subr.mxu0 0.0
  %1154 = vmatpush1.msra.mxu0 0.0
  %1155 = vmatprep.subr.mxu0 0.0
  %1156 = vmatpush1.msra.mxu0 0.0
  %1157 = vmatprep.subr.mxu0 0.0
  %1158 = vmatpush1.msra.mxu0 0.0
  %1159 = vmatprep.subr.mxu0 0.0
  %1160 = vmatpush1.msra.mxu0 0.0
  %1161 = vmatprep.subr.mxu0 0.0
  %1162 = vmatpush1.msra.mxu0 0.0
  %1163 = vmatprep.subr.mxu0 0.0
  %1164 = vmatpush1.msra.mxu0 0.0
  %1165 = vmatprep.subr.mxu0 0.0
  %1166 = vmatpush1.msra.mxu0 0.0
  %1167 = vmatprep.subr.mxu0 0.0
  %1168 = vmatpush1.msra.mxu0 0.0
  %1169 = vmatprep.subr.mxu0 0.0
  %1170 = vmatpush1.msra.mxu0 0.0
  %1171 = vmatprep.subr.mxu0 0.0
  %1172 = vmatpush1.msra.mxu0 0.0
  %1173 = vmatprep.subr.mxu0 0.0
  %1174 = vmatpush1.msra.mxu0 0.0
  %1175 = vmatprep.subr.mxu0 0.0
  %1176 = vmatpush1.msra.mxu0 0.0
  %1177 = vmatprep.subr.mxu0 0.0
  %1178 = vmatpush1.msra.mxu0 0.0
  %1179 = vmatprep.subr.mxu0 0.0
  %1180 = vmatpush1.msra.mxu0 0.0
  %1181 = vmatprep.subr.mxu0 0.0
  %1182 = vmatpush1.msra.mxu0 0.0
  %1183 = vmatprep.subr.mxu0 0.0
  %1184 = vmatpush1.msra.mxu0 0.0
  %1185 = vmatprep.subr.mxu0 0.0
  %1186 = vmatpush1.msra.mxu0 0.0
  %1187 = vmatprep.subr.mxu0 0.0
  %1188 = vmatpush1.msra.mxu0 0.0
  %1189 = vmatprep.subr.mxu0 0.0
  %1190 = vmatpush1.msra.mxu0 0.0
  %1191 = vmatprep.subr.mxu0 0.0
  %1192 = vmatpush1.msra.mxu0 0.0
  %1193 = vmatprep.subr.mxu0 0.0
  %1194 = vmatpush1.msra.mxu0 0.0
  %1195 = vmatprep.subr.mxu0 0.0
  %1196 = vmatpush1.msra.mxu0 0.0
  %1197 = vmatprep.subr.mxu0 0.0
  %1198 = vmatpush1.msra.mxu0 0.0
  %1199 = vmatprep.subr.mxu0 0.0
  %1200 = vmatpush1.msra.mxu0 0.0
  %1201 = vmatprep.subr.mxu0 0.0
  %1202 = vmatpush1.msra.mxu0 0.0
  %1203 = vmatprep.mubr.f32.mxu0 0.0
  %1204 = vmatmul.mubr.f32.gmra.mrb[0].mxu0 %v1137
  %v1205 = vpop.f32.mrb[0].mxu0
  %v1206 = vadd.f32 %v1132, %v1205
  %v1207 = vpop.f32.mrb[0].mxu0
  %1208 = vdwg.mxu0
  %vm1209 = vcmask 15360
  %1210 = vst.msk [vmem:[%s7] sm:$0xff] %vm1209, %v1206
  // Predicated region
  $region30: #{tpu_custom_call.1} parent=0 // pred_check
    _
  $region31: #{tpu_custom_call.1} parent=0 // pred_check_branch
    %1212 = sbr.rel (0) target = $region33
  $region32: #{tpu_custom_call.1} parent=0 // pred_region
    _
  $region33: #{tpu_custom_call.1} parent=0 // pred_fallthru
    _
  // Predicated region
  $region34: #{tpu_custom_call.1} parent=0 // pred_check
    _
  $region35: #{tpu_custom_call.1} parent=0 // pred_check_branch
    %1214 = sbr.rel (0) target = $region37
  $region36: #{tpu_custom_call.1} parent=0 // pred_region
    _
  $region37: #{tpu_custom_call.1} parent=0 // pred_fallthru
    _

</llo_original>
